<compile_context>
chip_gen: v7x
topology: tpu7x:2x2x1
jax: 0.10.0
libtpu: 0.0.40
codegen_flags: <defaults>
</compile_context>

<pallas_src>
import functools

import jax
import jax.numpy as jnp
from jax import lax
from jax.experimental import pallas as pl
from jax.experimental.pallas import tpu as pltpu


# Finite "minus infinity" for masking: exp(_NEG - c) underflows to exactly 0 in
# f32, with no inf/NaN arithmetic anywhere.
_NEG = -1e30


def _round_up(x, m):
    return ((x + m - 1) // m) * m


def _pick_tile(total, cap):
    """Largest t <= cap with t % 8 == 0 and total % t == 0 (None if impossible)."""
    for cand in range(min(cap, total), 7, -1):
        if cand % 8 == 0 and total % cand == 0:
            return cand
    return None


def _vmem_limit_bytes():
    """Generation-aware scoped-VMEM limit (~3/4 of physical; v7x-safe fallback)."""
    try:
        cap = int(pltpu.get_tpu_info().vmem_capacity_bytes)
    except Exception:
        cap = 64 * 1024 * 1024          # assume v7x (smallest VMEM) if unknown
    return int(cap * 3 // 4)            # 48 MiB on v7x, ~96 MiB on v5e/v6e


# --------------------------------------------------------------------------- #
# Prologue: L2-normalize both views (with the cosine eps clamp), fold in
# sqrt(1/T), precompute the positive-pair logits, and pack everything into one
# (2, B, D) buffer in the matmul dtype (bf16 by default).
# --------------------------------------------------------------------------- #
def _normalize_kernel(pi_ref, pj_ref, xn_ref, pos_ref, *, scale, store_dtype):
    xi = pi_ref[...].astype(jnp.float32)
    xj = pj_ref[...].astype(jnp.float32)

    def _norm(v):
        sq = jnp.sum(v * v, axis=-1, keepdims=True)
        # scale / max(||v||, 1e-8): matches torch CosineSimilarity eps handling,
        # with sqrt(1/T) folded in so every dot product already carries 1/T.
        return v * (lax.rsqrt(jnp.maximum(sq, 1e-16)) * scale)

    xi = _norm(xi)
    xj = _norm(xj)
    # Positive logit pos[r] = <xi_n[r], xj_n[r]> / T; reused by rows r and r+B.
    pos_ref[...] = jnp.sum(xi * xj, axis=-1, keepdims=True)
    xn_ref[0, :, :] = xi.astype(store_dtype)
    xn_ref[1, :, :] = xj.astype(store_dtype)


# --------------------------------------------------------------------------- #
# Main: tiled similarity + single-pass logsumexp with the static bound m = 1/T.
# --------------------------------------------------------------------------- #
def _ntxent_tile_kernel(x_row_ref, pos_ref, x_col_ref, loss_ref, l_sc, *,
                        inv_temp, tn, col_resident, b_valid, b_pad):
    i = pl.program_id(0)                      # row-tile index   ('parallel')
    j = pl.program_id(1)                      # column-tile index ('arbitrary')
    tm = x_row_ref.shape[0]

    @pl.when(j == 0)
    def _():
        l_sc[...] = jnp.zeros_like(l_sc)

    xr = x_row_ref[...]                       # (TM, D), already scaled by sqrt(1/T)
    if col_resident:
        # xn is VMEM-resident (fetched once); slice the current column tile.
        off = pl.multiple_of(j * tn, tn)
        xc = x_col_ref[pl.ds(off, tn), :]     # (TN, D)
    else:
        xc = x_col_ref[...]                   # streamed (TN, D) tile

    # (TM, TN) logits = cos_sim / T on the MXU; NT contraction over the feature
    # dim of both operands (no transpose on the critical path), f32 accumulate.
    s = lax.dot_general(xr, xc,
                        dimension_numbers=(((1,), (1,)), ((), ())),
                        preferred_element_type=jnp.float32)

    if b_valid < b_pad:
        # Zero-padded rows exist: mask padded columns out of the logsumexp.
        # (Static python gate -> zero cost when there is no padding.)
        col_g = lax.broadcasted_iota(jnp.int32, (tm, tn), 1) + j * tn
        invalid = jnp.logical_or(
            jnp.logical_and(col_g >= b_valid, col_g < b_pad),
            col_g >= b_pad + b_valid)
        s = jnp.where(invalid, _NEG, s)

    # Diagonal (self-similarity) mask, only on tiles that straddle the diagonal.
    row0 = i * tm
    col0 = j * tn
    straddles = jnp.logical_and(row0 < col0 + tn, col0 < row0 + tm)

    @pl.when(straddles)
    def _():
        col_ids = lax.broadcasted_iota(jnp.int32, (tm, tn), 1)
        row_ids = lax.broadcasted_iota(jnp.int32, (tm, 1), 0) + (row0 - col0)
        sm = jnp.where(col_ids == row_ids, _NEG, s)
        l_sc[...] += jnp.sum(jnp.exp(sm - inv_temp), axis=-1, keepdims=True)

    @pl.when(jnp.logical_not(straddles))
    def _():
        l_sc[...] += jnp.sum(jnp.exp(s - inv_temp), axis=-1, keepdims=True)

    @pl.when(j == pl.num_programs(1) - 1)
    def _():
        # lse = 1/T + log(sum exp(s - 1/T)); per-row loss = lse - pos.
        loss_ref[...] = (inv_temp + jnp.log(l_sc[...])) - pos_ref[...]


# --------------------------------------------------------------------------- #
# Wrapper
# --------------------------------------------------------------------------- #
def ntxent_loss(proj_i, proj_j, temperature, *, matmul_dtype=jnp.bfloat16):
    """NT-Xent / SimCLR loss. proj_i, proj_j: (B, D). Returns scalar f32.

    matmul_dtype=jnp.bfloat16 (default) runs the similarity matmul on the
    bf16-native MXU and stores the normalized buffer in bf16 (softmax math
    stays f32).  matmul_dtype=None keeps everything f32 for a tight match to
    the reference.
    """
    if proj_i.ndim != 2 or proj_i.shape != proj_j.shape:
        raise ValueError("proj_i and proj_j must both be (batch, feature)")
    bsz, d = proj_i.shape
    if bsz < 1:
        raise ValueError("batch must be >= 1")

    inv_temp = float(1.0 / temperature)
    scale = float(inv_temp ** 0.5)
    x_dtype = jnp.float32 if matmul_dtype is None else matmul_dtype
    x_bytes = jnp.dtype(x_dtype).itemsize
    vmem_limit = _vmem_limit_bytes()

    # ---- row tiling / padding ------------------------------------------------
    # Prefer a divisor tile of the 8-rounded batch; if the best divisor is tiny
    # (e.g. B = 8*prime), pad to a multiple of 128 and mask the padded rows.
    b8 = _round_up(bsz, 8)
    tm = _pick_tile(b8, 256)
    if tm is None or tm < min(b8, 128):
        tm = min(128, b8)
        b_pad = _round_up(bsz, tm)
    else:
        b_pad = b8
    if b_pad != bsz:
        pad = ((0, b_pad - bsz), (0, 0))
        proj_i = jnp.pad(proj_i, pad)     # zero rows -> normalize to exact zeros
        proj_j = jnp.pad(proj_j, pad)

    n = 2 * b_pad
    half_tiles = b_pad // tm
    n_row_tiles = n // tm                 # = 2*half_tiles: even and >= 2 (megacore)
    tn = _pick_tile(n, 1024)              # 512-1024 already saturates HBM roofline
    # Prologue row tile; keep its grid >= 2 when possible (v7x megacore).
    tp = _pick_tile(b_pad, min(512, max(8, b_pad // 2)))

    # ---- prologue: normalize + scale + positive logits ------------------------
    xn, pos = pl.pallas_call(
        functools.partial(_normalize_kernel, scale=scale, store_dtype=x_dtype),
        out_shape=(jax.ShapeDtypeStruct((2, b_pad, d), x_dtype),
                   jax.ShapeDtypeStruct((b_pad, 1), jnp.float32)),
        grid_spec=pltpu.PrefetchScalarGridSpec(
            num_scalar_prefetch=0,
            grid=(b_pad // tp,),
            in_specs=[pl.BlockSpec((tp, d), lambda r: (r, 0)),
                      pl.BlockSpec((tp, d), lambda r: (r, 0))],
            out_specs=[pl.BlockSpec((2, tp, d), lambda r: (0, r, 0)),
                       pl.BlockSpec((tp, 1), lambda r: (r, 0))],
        ),
        compiler_params=pltpu.CompilerParams(
            dimension_semantics=("parallel",),
            vmem_limit_bytes=vmem_limit),
    )(proj_i, proj_j)
    xn = xn.reshape(n, d)                 # contiguous -> free reshape, no concat

    # ---- column-operand residency decision ------------------------------------
    f32b = 4
    step_base = (2 * tm * d * x_bytes     # row block (double-buffered)
                 + 2 * tm * f32b          # pos block
                 + 2 * tm * f32b          # loss block
                 + tm * f32b              # l scratch
                 + 3 * tm * tn * f32b)    # (TM, TN) logits/exp intermediates
    resident_cost = 2 * n * d * x_bytes   # conservative: assume double-buffered
    col_resident = (step_base + resident_cost) <= int(0.8 * vmem_limit)

    if col_resident:
        col_spec = pl.BlockSpec((n, d), lambda i, j: (0, 0))      # fetched once
    else:
        col_spec = pl.BlockSpec((tn, d), lambda i, j: (j, 0))     # streamed

    kernel = functools.partial(
        _ntxent_tile_kernel,
        inv_temp=inv_temp, tn=tn, col_resident=col_resident,
        b_valid=bsz, b_pad=b_pad)

    per_row = pl.pallas_call(
        kernel,
        out_shape=jax.ShapeDtypeStruct((n, 1), jnp.float32),
        grid_spec=pltpu.PrefetchScalarGridSpec(
            num_scalar_prefetch=0,
            grid=(n_row_tiles, n // tn),
            in_specs=[
                pl.BlockSpec((tm, d), lambda i, j: (i, 0)),                  # rows
                pl.BlockSpec((tm, 1), lambda i, j: (i % half_tiles, 0)),     # pos
                col_spec,                                                    # cols
            ],
            out_specs=pl.BlockSpec((tm, 1), lambda i, j: (i, 0)),
            scratch_shapes=[pltpu.VMEM((tm, 1), jnp.float32)],   # running sum
        ),
        compiler_params=pltpu.CompilerParams(
            dimension_semantics=("parallel", "arbitrary"),
            vmem_limit_bytes=vmem_limit),
    )(xn, pos, xn)

    # Tiny wrapper-side reduction; padded rows (if any) are excluded.
    if b_pad == bsz:
        total = jnp.sum(per_row)
    else:
        total = jnp.sum(per_row.reshape(2, b_pad)[:, :bsz])
    return total / (2 * bsz)


# --------------------------------------------------------------------------- #
# Pure-JAX reference mirroring the PyTorch module.
# --------------------------------------------------------------------------- #
def _ntxent_reference(proj_i, proj_j, temperature):
    reps = jnp.concatenate([proj_i, proj_j], axis=0).astype(jnp.float32)
    n = reps.shape[0]
    bsz = n // 2
    norm = jnp.maximum(jnp.linalg.norm(reps, axis=-1, keepdims=True), 1e-8)
    x = reps / norm
    sim = jnp.dot(x, x.T, precision=lax.Precision.HIGHEST)
    sim = jnp.where(jnp.eye(n, dtype=bool), -jnp.inf, sim) / temperature
    labels = jnp.concatenate([jnp.arange(bsz, 2 * bsz), jnp.arange(bsz)])
    lse = jax.scipy.special.logsumexp(sim, axis=-1)
    pos = sim[jnp.arange(n), labels]
    return jnp.sum(lse - pos) / n


if __name__ == "__main__":
    batch, feat = 8, 32
    temperature = 0.5
    key = jax.random.PRNGKey(0)
    k1, k2 = jax.random.split(key)
    proj_i = jax.random.normal(k1, (batch, feat), dtype=jnp.float32)
    proj_j = jax.random.normal(k2, (batch, feat), dtype=jnp.float32)

    ref = _ntxent_reference(proj_i, proj_j, temperature)

    # Default fast path: bf16 MXU + bf16 normalized buffer (softmax math in f32).
    loss_bf16 = jax.block_until_ready(ntxent_loss(proj_i, proj_j, temperature))
    assert jnp.allclose(loss_bf16, ref, rtol=2e-2, atol=2e-2), (loss_bf16, ref)

    # f32 MXU path matches the reference tightly.
    loss_f32 = jax.block_until_ready(
        ntxent_loss(proj_i, proj_j, temperature, matmul_dtype=None))
    assert jnp.allclose(loss_f32, ref, rtol=1e-4, atol=1e-4), (loss_f32, ref)

    # Padded path: batch that is not a multiple of 8 (previously unsupported).
    pi_odd, pj_odd = proj_i[:6], proj_j[:6]
    ref_odd = _ntxent_reference(pi_odd, pj_odd, temperature)
    loss_odd = jax.block_until_ready(
        ntxent_loss(pi_odd, pj_odd, temperature, matmul_dtype=None))
    assert jnp.allclose(loss_odd, ref_odd, rtol=1e-4, atol=1e-4), (loss_odd, ref_odd)

    print("KERNEL_OK")
</pallas_src>

<mosaic_0001>
module attributes {stable_mosaic.version = 11 : i64} {
  func.func @_normalize_kernel(%arg0: i32, %arg1: memref<8x32xf32, #tpu.memory_space<vmem>>, %arg2: memref<8x32xf32, #tpu.memory_space<vmem>>, %arg3: memref<2x8x32xbf16, #tpu.memory_space<vmem>>, %arg4: memref<8x1xf32, #tpu.memory_space<vmem>>) attributes {dimension_semantics = [#tpu.dimension_semantics<parallel>], iteration_bounds = array<i64: 1>, scalar_prefetch = 0 : i64, scratch_operands = 0 : i64, tpu.core_type = #tpu.core_type<tc>, window_params = [{transform_indices = @transform_0, window_bounds = array<i64: 8, 32>}, {transform_indices = @transform_1, window_bounds = array<i64: 8, 32>}, {transform_indices = @transform_2, window_bounds = array<i64: 2, 8, 32>}, {transform_indices = @transform_3, window_bounds = array<i64: 8, 1>}]} {
    %c0 = arith.constant 0 : index
    %c0_0 = arith.constant 0 : index
    %0 = vector.load %arg1[%c0, %c0_0] : memref<8x32xf32, #tpu.memory_space<vmem>>, vector<8x32xf32>
    %c0_1 = arith.constant 0 : index
    %c0_2 = arith.constant 0 : index
    %1 = vector.load %arg2[%c0_1, %c0_2] : memref<8x32xf32, #tpu.memory_space<vmem>>, vector<8x32xf32>
    %2 = arith.mulf %0, %0 : vector<8x32xf32>
    %cst = arith.constant dense<0.000000e+00> : vector<8xf32>
    %3 = vector.multi_reduction <add>, %2, %cst [1] : vector<8x32xf32> to vector<8xf32>
    %4 = vector.shape_cast %3 : vector<8xf32> to vector<8x1xf32>
    %cst_3 = arith.constant 1.000000e-16 : f32
    %5 = vector.broadcast %cst_3 : f32 to vector<8x1xf32>
    %6 = arith.maximumf %4, %5 : vector<8x1xf32>
    %7 = math.rsqrt %6 : vector<8x1xf32>
    %cst_4 = arith.constant 1.41421354 : f32
    %8 = vector.broadcast %cst_4 : f32 to vector<8x1xf32>
    %9 = arith.mulf %7, %8 : vector<8x1xf32>
    %10 = vector.broadcast %9 : vector<8x1xf32> to vector<8x32xf32>
    %11 = arith.mulf %0, %10 : vector<8x32xf32>
    %12 = arith.mulf %1, %1 : vector<8x32xf32>
    %cst_5 = arith.constant dense<0.000000e+00> : vector<8xf32>
    %13 = vector.multi_reduction <add>, %12, %cst_5 [1] : vector<8x32xf32> to vector<8xf32>
    %14 = vector.shape_cast %13 : vector<8xf32> to vector<8x1xf32>
    %cst_6 = arith.constant 1.000000e-16 : f32
    %15 = vector.broadcast %cst_6 : f32 to vector<8x1xf32>
    %16 = arith.maximumf %14, %15 : vector<8x1xf32>
    %17 = math.rsqrt %16 : vector<8x1xf32>
    %cst_7 = arith.constant 1.41421354 : f32
    %18 = vector.broadcast %cst_7 : f32 to vector<8x1xf32>
    %19 = arith.mulf %17, %18 : vector<8x1xf32>
    %20 = vector.broadcast %19 : vector<8x1xf32> to vector<8x32xf32>
    %21 = arith.mulf %1, %20 : vector<8x32xf32>
    %22 = arith.mulf %11, %21 : vector<8x32xf32>
    %cst_8 = arith.constant dense<0.000000e+00> : vector<8xf32>
    %23 = vector.multi_reduction <add>, %22, %cst_8 [1] : vector<8x32xf32> to vector<8xf32>
    %24 = vector.shape_cast %23 : vector<8xf32> to vector<8x1xf32>
    %c0_9 = arith.constant 0 : index
    %c0_10 = arith.constant 0 : index
    %25 = vector.load %arg4[%c0_9, %c0_10] : memref<8x1xf32, #tpu.memory_space<vmem>>, vector<8x1xf32>
    tpu.vector_store %arg4[%c0_9, %c0_10], %24 {strides = array<i32>} : memref<8x1xf32, #tpu.memory_space<vmem>>, vector<8x1xf32>,
    %26 = arith.truncf %11 : vector<8x32xf32> to vector<8x32xbf16>
    %c0_11 = arith.constant 0 : index
    %c0_12 = arith.constant 0 : index
    %c0_13 = arith.constant 0 : index
    %27 = vector.load %arg3[%c0_11, %c0_12, %c0_13] : memref<2x8x32xbf16, #tpu.memory_space<vmem>>, vector<1x8x32xbf16>
    %28 = vector.shape_cast %27 : vector<1x8x32xbf16> to vector<8x32xbf16>
    %29 = vector.shape_cast %26 : vector<8x32xbf16> to vector<1x8x32xbf16>
    tpu.vector_store %arg3[%c0_11, %c0_12, %c0_13], %29 {strides = array<i32>} : memref<2x8x32xbf16, #tpu.memory_space<vmem>>, vector<1x8x32xbf16>,
    %30 = arith.truncf %21 : vector<8x32xf32> to vector<8x32xbf16>
    %c1 = arith.constant 1 : index
    %c0_14 = arith.constant 0 : index
    %c0_15 = arith.constant 0 : index
    %31 = vector.load %arg3[%c1, %c0_14, %c0_15] : memref<2x8x32xbf16, #tpu.memory_space<vmem>>, vector<1x8x32xbf16>
    %32 = vector.shape_cast %31 : vector<1x8x32xbf16> to vector<8x32xbf16>
    %33 = vector.shape_cast %30 : vector<8x32xbf16> to vector<1x8x32xbf16>
    tpu.vector_store %arg3[%c1, %c0_14, %c0_15], %33 {strides = array<i32>} : memref<2x8x32xbf16, #tpu.memory_space<vmem>>, vector<1x8x32xbf16>,
    return
  }
  func.func @transform_0(%arg0: i32) -> (i32, i32) {
    %c0_i32 = arith.constant 0 : i32
    %c0_i32_0 = arith.constant 0 : i32
    return %arg0, %c0_i32 : i32, i32
  }
  func.func @transform_1(%arg0: i32) -> (i32, i32) {
    %c0_i32 = arith.constant 0 : i32
    %c0_i32_0 = arith.constant 0 : i32
    return %arg0, %c0_i32 : i32, i32
  }
  func.func @transform_2(%arg0: i32) -> (i32, i32, i32) {
    %c0_i32 = arith.constant 0 : i32
    %c0_i32_0 = arith.constant 0 : i32
    %c0_i32_1 = arith.constant 0 : i32
    return %c0_i32, %arg0, %c0_i32_0 : i32, i32, i32
  }
  func.func @transform_3(%arg0: i32) -> (i32, i32) {
    %c0_i32 = arith.constant 0 : i32
    %c0_i32_0 = arith.constant 0 : i32
    return %arg0, %c0_i32 : i32, i32
  }
}

</mosaic_0001>

<llo_original>
// kernel: tpu_custom_call.1
$region0: #{tpu_custom_call.1}
  #allocation0 [shape = 'u32[]', space=smem, size = 0x4, offset = 0x4, fixed_abs, tag = 'smem constant byte address 0x4 - core index']
  #allocation1 [shape = 'u32[144,128]{1,0:T(1,128)}', space=vmem, size = 0x12000, scoped, tag = 'internal scratch']
  %s0 = inlined_call_operand.hbm [shape: f32[8,32], index: 0, kind: input, shape index: {}]
  %s1 = inlined_call_operand.hbm [shape: f32[8,32], index: 1, kind: input, shape index: {}]
  %s2 = inlined_call_operand.hbm [shape: bf16[2,8,32], index: 2, kind: output, shape index: {0}]
  %s3 = inlined_call_operand.vmem [shape: f32[8,1], index: 3, kind: output, shape index: {1}]
  %4 = xla_tuple %s2, %s3
  %s5 = sld [smem:[#allocation0]]
  $region34: #{tpu_custom_call.1} parent=0
    _
  %s7 = ssub.s32 1, %s5
  %s8 = scalar_select 0, %s7, %s5
  $region1: #{tpu_custom_call.1} parent=0
    #allocation2 [shape = 'u8[4096]{0}', space=vmem, size = 0x1000, scoped, tag = 'input window, operand 0, single buffered']
    #allocation3 [shape = 's32[1]{0}', space=sflag, size = 0x4, scoped, tag = 'scoped memory for tpu_custom_call.1']
    #allocation4 [shape = 's32[1]{0}', space=sflag, size = 0x4, scoped, tag = 'scoped memory for tpu_custom_call.1']
    #allocation5 [shape = 'u8[4096]{0}', space=vmem, size = 0x1000, scoped, tag = 'input window, operand 1, single buffered']
    #allocation6 [shape = 's32[1]{0}', space=sflag, size = 0x4, scoped, tag = 'scoped memory for tpu_custom_call.1']
    #allocation7 [shape = 'u8[4096]{0}', space=vmem, size = 0x1000, scoped, tag = 'output window, operand 0, single buffered']
    %9 = vsyncpa [#allocation3], 0
    %10 = vsyncpa [#allocation6], 0
    %11 = vsyncpa [#allocation4], 0
    // Predicated region
    $region2: #{tpu_custom_call.1} parent=1 // pred_check
      _
    $region3: #{tpu_custom_call.1} parent=1 // pred_check_branch
      %13 = sbr.rel (0) target = $region5
    $region4: #{tpu_custom_call.1} parent=1 // pred_region
      %s15 = ssub.s32 128, 128
      %16 = vsyncadd [#allocation3], %s15
      %s18 = sshll.u32 [#allocation2], 4
      %s19 = int_to_ptr.vmem [resolvable:$true] %s18
      %21 = dma.hbm_to_vmem [thread:$0]  %s0, 128, %s19, [#allocation3]
    $region5: #{tpu_custom_call.1} parent=1 // pred_fallthru
      _
    // Predicated region
    $region6: #{tpu_custom_call.1} parent=1 // pred_check
      _
    $region7: #{tpu_custom_call.1} parent=1 // pred_check_branch
      %23 = sbr.rel (0) target = $region9
    $region8: #{tpu_custom_call.1} parent=1 // pred_region
      %s25 = ssub.s32 128, 128
      %26 = vsyncadd [#allocation6], %s25
      %s28 = sshll.u32 [#allocation5], 4
      %s29 = int_to_ptr.vmem [resolvable:$true] %s28
      %31 = dma.hbm_to_vmem [thread:$0]  %s1, 128, %s29, [#allocation6]
    $region9: #{tpu_custom_call.1} parent=1 // pred_fallthru
      _
    // Predicated region
    $region10: #{tpu_custom_call.1} parent=1 // pred_check
      _
    $region11: #{tpu_custom_call.1} parent=1 // pred_check_branch
      %33 = sbr.rel (0) target = $region13
    $region12: #{tpu_custom_call.1} parent=1 // pred_region
      %34 = dma.done [#allocation3], 128
    $region13: #{tpu_custom_call.1} parent=1 // pred_fallthru
      _
    // Predicated region
    $region14: #{tpu_custom_call.1} parent=1 // pred_check
      _
    $region15: #{tpu_custom_call.1} parent=1 // pred_check_branch
      %36 = sbr.rel (0) target = $region17
    $region16: #{tpu_custom_call.1} parent=1 // pred_region
      %37 = dma.done [#allocation6], 128
    $region17: #{tpu_custom_call.1} parent=1 // pred_fallthru
      _
    %v38 = vld [vmem:[#allocation2] sm:$0xff]
    %v39 = vld [vmem:[#allocation5] sm:$0xff]
    %v40 = vmul.f32 %v38, %v38
    %vm41 = vcmask 261120
    %v42 = vsel %vm41, %v40, 0.0
    %43 = vadd.xlane.f32.xlu0 %v42
    %v44 = vpop.xlane.xlu0 %43
    %v45 = vmax.f32 %v44, 1e-16
    %v46 = vrsqrt.pop %v45
    %v47 = vmul.f32 %v46, 1.4142135
    %v48 = vmul.f32 %v38, %v47
    %v49 = vmul.f32 %v39, %v39
    %v50 = vsel %vm41, %v49, 0.0
    %51 = vadd.xlane.f32.xlu0 %v50
    %v52 = vpop.xlane.xlu0 %51
    %v53 = vmax.f32 %v52, 1e-16
    %v54 = vrsqrt.pop %v53
    %v55 = vmul.f32 %v54, 1.4142135
    %v56 = vmul.f32 %v39, %v55
    %v57 = vmul.f32 %v48, %v56
    %v58 = vsel %vm41, %v57, 0.0
    %59 = vadd.xlane.f32.xlu0 %v58
    %v60 = vpop.xlane.xlu0 %59
    %vm61 = vcmask 7168
    %62 = vst.msk [vmem:[%s3] sm:$0xff] %vm61, %v60
    %v63 = vpack.c.bf16 %v48, %v48
    %vm64 = vcmask 257024
    %65 = vst.msk [vmem:[#allocation7] sm:$0xf] %vm64, %v63
    %v66 = vpack.c.bf16 %v56, %v56
    %s67 = scalar_lea.vmem [#allocation7], 4
    %68 = vst.msk [vmem:[%s67] sm:$0xf] %vm64, %v66
    // Predicated region
    $region18: #{tpu_custom_call.1} parent=1 // pred_check
      _
    $region19: #{tpu_custom_call.1} parent=1 // pred_check_branch
      %70 = sbr.rel (0) target = $region21
    $region20: #{tpu_custom_call.1} parent=1 // pred_region
      %s72 = ssub.s32 128, 128
      %73 = vsyncadd [#allocation4], %s72
      %s74 = sshll.u32 [#allocation7], 4
      %s75 = int_to_ptr.vmem [resolvable:$true] %s74
      %80 = dma.vmem_to_hbm [thread:$0]  %s75, 128, %s2, [#allocation4], 64, 64, 4
    $region21: #{tpu_custom_call.1} parent=1 // pred_fallthru
      _
    // Predicated region
    $region22: #{tpu_custom_call.1} parent=1 // pred_check
      _
    $region23: #{tpu_custom_call.1} parent=1 // pred_check_branch
      %82 = sbr.rel (0) target = $region25
    $region24: #{tpu_custom_call.1} parent=1 // pred_region
      _
    $region25: #{tpu_custom_call.1} parent=1 // pred_fallthru
      _
    // Predicated region
    $region26: #{tpu_custom_call.1} parent=1 // pred_check
      _
    $region27: #{tpu_custom_call.1} parent=1 // pred_check_branch
      %84 = sbr.rel (0) target = $region29
    $region28: #{tpu_custom_call.1} parent=1 // pred_region
      %85 = dma.done [#allocation4], 128
    $region29: #{tpu_custom_call.1} parent=1 // pred_fallthru
      _
    // Predicated region
    $region30: #{tpu_custom_call.1} parent=1 // pred_check
      _
    $region31: #{tpu_custom_call.1} parent=1 // pred_check_branch
      %87 = sbr.rel (0) target = $region33
    $region32: #{tpu_custom_call.1} parent=1 // pred_region
      _
    $region33: #{tpu_custom_call.1} parent=1 // pred_fallthru
      _
    %88 = vsyncpa [#allocation3], 1
    %89 = vsyncpa [#allocation6], 1
    %90 = vsyncpa [#allocation4], 1

</llo_original>
